<compile_context>
chip_gen: v5e
topology: v5e:2x2
jax: 0.10.0
libtpu: 0.0.40
codegen_flags: <defaults>
</compile_context>

<pallas_src>
from functools import partial

import jax
import jax.numpy as jnp
from jax.experimental import pallas as pl
from jax.experimental.pallas import tpu as pltpu


def upsample_kernel(x_ref, uh_ref, kmat_ref, out_ref):
    # x_ref:    (Bb, H, W*Cin)     f32, lane-dense flattened NHWC input block
    # uh_ref:   (2H, H)            bf16 H-direction bilinear upsample matrix
    # kmat_ref: (W*Cin, 2W*Cout)   bf16 kron(U_W^T, Wconv): fused W-up + 1x1 conv
    # out_ref:  (Bb, 2H, 2W*Cout)  f32, lane-dense flattened NHWC output block
    bb, h, wcin = x_ref.shape

    # Fold the batch sub-block into the MXU M dimension (H is a multiple of 8,
    # so this merge is layout-trivial), cast to bf16 for the fast MXU path.
    x = x_ref[...].reshape(bb * h, wcin).astype(jnp.bfloat16)
    t = jnp.dot(x, kmat_ref[...], preferred_element_type=jnp.float32)  # (Bb*H, 2W*Cout)
    t = t.reshape(bb, h, -1).astype(jnp.bfloat16)

    uh = uh_ref[...]
    for i in range(bb):  # Bb is small & static: per-image H-upsample matmul
        y = jnp.dot(uh, t[i], preferred_element_type=jnp.float32)      # (2H, 2W*Cout)
        out_ref[i] = y.astype(out_ref.dtype)


def _bilinear_up2_matrix(n):
    """(2n, n) row-stochastic matrix of PyTorch bilinear scale=2,
    align_corners=False interpolation weights."""
    o = jnp.arange(2 * n, dtype=jnp.float32)
    src = jnp.maximum((o + 0.5) * 0.5 - 0.5, 0.0)
    i0 = jnp.minimum(jnp.floor(src).astype(jnp.int32), n - 1)
    i1 = jnp.minimum(i0 + 1, n - 1)
    f = src - i0.astype(jnp.float32)
    rows = jnp.arange(2 * n)
    u = jnp.zeros((2 * n, n), jnp.float32)
    u = u.at[rows, i0].add(1.0 - f)
    u = u.at[rows, i1].add(f)
    return u


def make_upsample_constants(w_conv, H, W):
    """Precompute (once per weight set / shape) the bf16 upsample matrices.

    w_conv: (Cout, Cin, 1, 1) OIHW 1x1 conv weight (no bias).
    Returns u_h (2H, H) bf16 and kmat (W*Cin, 2W*Cout) bf16.
    """
    Cout, Cin = w_conv.shape[0], w_conv.shape[1]
    u_h = _bilinear_up2_matrix(H)                 # (2H, H)  values exact in bf16
    u_w = _bilinear_up2_matrix(W)                 # (2W, W)
    wc = w_conv.reshape(Cout, Cin).T              # (Cin, Cout)
    kmat = jnp.kron(u_w.T, wc)                    # (W*Cin, 2W*Cout)
    return u_h.astype(jnp.bfloat16), kmat.astype(jnp.bfloat16)


@partial(jax.jit, static_argnames=("block_batch",))
def upsample_forward_nhwc(x_nhwc, u_h, kmat, *, block_batch=1):
    """NHWC-native forward: x (B, H, W, Cin) f32 -> (B, 2H, 2W, Cout) f32.

    block_batch: images folded per grid step.  Keep grid length >= 2 on v7x
    (2 TCs/chip); on single-TC v5e/v6e, block_batch=B collapses the grid and
    amortizes per-step overhead.
    """
    B, H, W, Cin = x_nhwc.shape
    Cout = kmat.shape[1] // (2 * W)
    assert B % block_batch == 0
    Bb = block_batch

    # Free reshape (contiguous); stays f32 -- cast to bf16 happens in-kernel.
    x_flat = x_nhwc.reshape(B, H, W * Cin)

    flops = (2 * B * H * (W * Cin) * (2 * W * Cout)
             + 2 * B * (2 * H) * H * (2 * W * Cout))
    bytes_accessed = (x_flat.size * x_flat.dtype.itemsize
                      + u_h.size * 2 + kmat.size * 2
                      + B * (2 * H) * (2 * W) * Cout * 4)

    out_flat = pl.pallas_call(
        upsample_kernel,
        out_shape=jax.ShapeDtypeStruct((B, 2 * H, 2 * W * Cout), jnp.float32),
        grid_spec=pltpu.PrefetchScalarGridSpec(
            num_scalar_prefetch=0,
            grid=(B // Bb,),
            in_specs=[
                pl.BlockSpec((Bb, H, W * Cin), lambda b: (b, 0, 0)),
                # Grid-invariant operands: constant index_map => DMA'd once.
                pl.BlockSpec((2 * H, H), lambda b: (0, 0)),
                pl.BlockSpec((W * Cin, 2 * W * Cout), lambda b: (0, 0)),
            ],
            out_specs=pl.BlockSpec((Bb, 2 * H, 2 * W * Cout), lambda b: (b, 0, 0)),
        ),
        compiler_params=pltpu.CompilerParams(
            dimension_semantics=("parallel",)),
        cost_estimate=pl.CostEstimate(
            flops=flops, transcendentals=0, bytes_accessed=bytes_accessed),
    )(x_flat, u_h, kmat)

    return out_flat.reshape(B, 2 * H, 2 * W, Cout)


def upsample_forward_nchw(x_nchw, u_h, kmat, *, block_batch=1):
    """PyTorch-parity adapter: NCHW in / NCHW out.  The transposes here are
    pure layout plumbing -- prefer upsample_forward_nhwc when the surrounding
    network can stay NHWC."""
    x_nhwc = jnp.transpose(x_nchw, (0, 2, 3, 1))
    out_nhwc = upsample_forward_nhwc(x_nhwc, u_h, kmat, block_batch=block_batch)
    return jnp.transpose(out_nhwc, (0, 3, 1, 2))


def upsample_reference(x, w):
    """Direct gather/lerp f32 reference (PyTorch bilinear align_corners=False
    semantics) followed by the 1x1 conv -- independent of the separable matrix
    factorization used by the kernel."""
    B, C, H, W = x.shape
    Cout = w.shape[0]

    def src(o, n):
        s = jnp.maximum((o.astype(jnp.float32) + 0.5) * 0.5 - 0.5, 0.0)
        i0 = jnp.minimum(jnp.floor(s).astype(jnp.int32), n - 1)
        i1 = jnp.minimum(i0 + 1, n - 1)
        return i0, i1, s - i0.astype(jnp.float32)

    h0, h1, fh = src(jnp.arange(2 * H), H)
    w0, w1, fw = src(jnp.arange(2 * W), W)
    x00 = x[:, :, h0][:, :, :, w0]
    x01 = x[:, :, h0][:, :, :, w1]
    x10 = x[:, :, h1][:, :, :, w0]
    x11 = x[:, :, h1][:, :, :, w1]
    fh = fh[None, None, :, None]
    fw = fw[None, None, None, :]
    up = (x00 * (1 - fh) * (1 - fw) + x01 * (1 - fh) * fw
          + x10 * fh * (1 - fw) + x11 * fh * fw)
    return jnp.einsum('bchw,oc->bohw', up, w.reshape(Cout, C))


if __name__ == "__main__":
    # UpSample(in_channels=16, s_factor=8): bilinear 2x + Conv2d(24 -> 16, 1x1, bias=False)
    B, in_channels, s_factor = 2, 16, 8
    Cin = in_channels + s_factor
    Cout = in_channels
    H = W = 16

    key = jax.random.PRNGKey(0)
    k0, k1 = jax.random.split(key, 2)
    x = jax.random.normal(k0, (B, Cin, H, W), dtype=jnp.float32)
    w = jax.random.normal(k1, (Cout, Cin, 1, 1), dtype=jnp.float32) * 0.1

    # Hoisted: built once per weight set, reused by every forward call.
    u_h, kmat = make_upsample_constants(w, H, W)

    out = jax.block_until_ready(upsample_forward_nchw(x, u_h, kmat))
    ref = jax.block_until_ready(upsample_reference(x, w))

    assert out.shape == (B, Cout, 2 * H, 2 * W)
    # bf16 operands (f32 accumulation) -> relaxed tolerance vs. f32 reference.
    rel_err = float(jnp.max(jnp.abs(out - ref)) / jnp.max(jnp.abs(ref)))
    assert rel_err < 2.5e-2, rel_err
    print("KERNEL_OK")
</pallas_src>

<mosaic_0001>
module attributes {stable_mosaic.version = 11 : i64} {
  func.func @upsample_kernel(%arg0: i32, %arg1: memref<1x16x384xf32, #tpu.memory_space<vmem>>, %arg2: memref<32x16xbf16, #tpu.memory_space<vmem>>, %arg3: memref<384x512xbf16, #tpu.memory_space<vmem>>, %arg4: memref<1x32x512xf32, #tpu.memory_space<vmem>>) attributes {dimension_semantics = [#tpu.dimension_semantics<parallel>], iteration_bounds = array<i64: 2>, scalar_prefetch = 0 : i64, scratch_operands = 0 : i64, tpu.core_type = #tpu.core_type<tc>, window_params = [{transform_indices = @transform_0, window_bounds = array<i64: 1, 16, 384>}, {pipeline_mode = #tpu.pipeline_mode<synchronous>, transform_indices = @transform_1, window_bounds = array<i64: 32, 16>}, {pipeline_mode = #tpu.pipeline_mode<synchronous>, transform_indices = @transform_2, window_bounds = array<i64: 384, 512>}, {transform_indices = @transform_3, window_bounds = array<i64: 1, 32, 512>}]} {
    %c0 = arith.constant 0 : index
    %c0_0 = arith.constant 0 : index
    %c0_1 = arith.constant 0 : index
    %0 = vector.load %arg1[%c0, %c0_0, %c0_1] : memref<1x16x384xf32, #tpu.memory_space<vmem>>, vector<1x16x384xf32>
    %1 = vector.shape_cast %0 : vector<1x16x384xf32> to vector<16x384xf32>
    %2 = arith.truncf %1 : vector<16x384xf32> to vector<16x384xbf16>
    %c0_2 = arith.constant 0 : index
    %c0_3 = arith.constant 0 : index
    %3 = vector.load %arg3[%c0_2, %c0_3] : memref<384x512xbf16, #tpu.memory_space<vmem>>, vector<384x512xbf16>
    %cst = arith.constant dense<0.000000e+00> : vector<16x512xf32>
    %4 = tpu.matmul %2, %3, %cst {dimension_numbers = #tpu.dot_dimension_numbers<[1], [0], [0], [1], [0, 0, 1, 1], [], []>} : vector<16x384xbf16>, vector<384x512xbf16>, vector<16x512xf32> -> vector<16x512xf32>
    %5 = vector.shape_cast %4 : vector<16x512xf32> to vector<1x16x512xf32>
    %6 = arith.truncf %5 : vector<1x16x512xf32> to vector<1x16x512xbf16>
    %c0_4 = arith.constant 0 : index
    %c0_5 = arith.constant 0 : index
    %7 = vector.load %arg2[%c0_4, %c0_5] : memref<32x16xbf16, #tpu.memory_space<vmem>>, vector<32x16xbf16>
    %8 = vector.shape_cast %6 : vector<1x16x512xbf16> to vector<16x512xbf16>
    %cst_6 = arith.constant dense<0.000000e+00> : vector<32x512xf32>
    %9 = tpu.matmul %7, %8, %cst_6 {dimension_numbers = #tpu.dot_dimension_numbers<[1], [0], [0], [1], [0, 0, 1, 1], [], []>} : vector<32x16xbf16>, vector<16x512xbf16>, vector<32x512xf32> -> vector<32x512xf32>
    %c0_7 = arith.constant 0 : index
    %c0_8 = arith.constant 0 : index
    %c0_9 = arith.constant 0 : index
    %10 = vector.load %arg4[%c0_7, %c0_8, %c0_9] : memref<1x32x512xf32, #tpu.memory_space<vmem>>, vector<1x32x512xf32>
    %11 = vector.shape_cast %10 : vector<1x32x512xf32> to vector<32x512xf32>
    %12 = vector.shape_cast %9 : vector<32x512xf32> to vector<1x32x512xf32>
    tpu.vector_store %arg4[%c0_7, %c0_8, %c0_9], %12 {strides = array<i32>} : memref<1x32x512xf32, #tpu.memory_space<vmem>>, vector<1x32x512xf32>,
    return
  }
  func.func @transform_0(%arg0: i32) -> (i32, i32, i32) {
    %c0_i32 = arith.constant 0 : i32
    %c0_i32_0 = arith.constant 0 : i32
    %c0_i32_1 = arith.constant 0 : i32
    return %arg0, %c0_i32, %c0_i32_0 : i32, i32, i32
  }
  func.func @transform_1(%arg0: i32) -> (i32, i32) {
    %c0_i32 = arith.constant 0 : i32
    %c0_i32_0 = arith.constant 0 : i32
    %c0_i32_1 = arith.constant 0 : i32
    return %c0_i32, %c0_i32_0 : i32, i32
  }
  func.func @transform_2(%arg0: i32) -> (i32, i32) {
    %c0_i32 = arith.constant 0 : i32
    %c0_i32_0 = arith.constant 0 : i32
    %c0_i32_1 = arith.constant 0 : i32
    return %c0_i32, %c0_i32_0 : i32, i32
  }
  func.func @transform_3(%arg0: i32) -> (i32, i32, i32) {
    %c0_i32 = arith.constant 0 : i32
    %c0_i32_0 = arith.constant 0 : i32
    %c0_i32_1 = arith.constant 0 : i32
    return %arg0, %c0_i32, %c0_i32_0 : i32, i32, i32
  }
}

</mosaic_0001>

<llo_original>
// kernel: upsample_forward_nhwc.1
$region0: #{upsample_forward_nhwc.1}
  #allocation0 [shape = 'u32[]', space=smem, size = 0x4, offset = 0x4, fixed_abs, tag = 'smem constant byte address 0x4 - core index']
  #allocation1 [shape = 'u32[72,128]{1,0:T(1,128)}', space=vmem, size = 0x9000, scoped, tag = 'internal scratch']
  %s0 = inlined_call_operand.vmem [shape: f32[2,16,384], index: 0, kind: input, shape index: {}]
  %s1 = inlined_call_operand.vmem [shape: bf16[32,16], index: 1, kind: input, shape index: {}]
  %s2 = inlined_call_operand.hbm [shape: bf16[384,512], index: 2, kind: input, shape index: {}]
  %s3 = inlined_call_operand.vmem [shape: f32[2,32,512], index: 3, kind: output, shape index: {}]
  %s4 = sld [smem:[#allocation0]]
  $region49: #{upsample_forward_nhwc.1} parent=0
    _
  %s6 = ssub.s32 1, %s4
  %s7 = scalar_select 0, %s6, %s4
  $region1: #{upsample_forward_nhwc.1} parent=0
    #allocation2 [shape = 'u8[393216]{0}', space=vmem, size = 0x60000, scoped, tag = 'input window, operand 2, single buffered']
    #allocation3 [shape = 's32[2]{0}', space=sflag, size = 0x8, scoped, tag = 'scoped memory for upsample_forward_nhwc.1']
    %8 = vsyncpa [#allocation3], 0
    loop: start=0, step=1, limit=4
    $region2: #{upsample_forward_nhwc.1} parent=1 // loop_pre_header
      _
    $region3: #{upsample_forward_nhwc.1} parent=1 // loop_header
      %s10 = sphi 0, %s14
      %p11 = scmp.ge.s32.totalorder %s10, 4
      %s20 = sphi 0, %s22
      %s23 = sphi 0, %s20
      %s24 = sphi 0, %s23
      %s40 = sphi 0, %s24
      %s44 = sphi 0, %s44
      %s46 = sphi 0, %s44
      %s47 = sphi 0, %s46
      %s61 = sphi 0, %s47
      %s65 = sphi 0, %s65
      %s67 = sphi 0, %s65
      %s68 = sphi 0, %s67
      %s82 = sphi 0, %s68
      %s88 = sphi 0, %s90
      %s91 = sphi 0, %s88
      %s92 = sphi 0, %s91
      %s108 = sphi 0, %s92
    $region4: #{upsample_forward_nhwc.1} parent=1 // loop_header_branch
      %13 = sbr.rel (%p11) target = $region8
    $region5: #{upsample_forward_nhwc.1} parent=1 // loop_body
      %s15 = ssub.s32 %s10, 1
      %s16 = ssub.s32 %s10, 2
      %s17 = sadd.s32 %s10, 1
      %s18 = ssub.s32 %s10, %s17
      %p19 = scmp.eq.s32.totalorder %s18, 0
      %s21 = sadd.s32 %s20, 1
      %s22 = scalar_select %p19, %s20, %s21
      %p25 = pneg %p19
      %p26 = scmp.eq.s32.totalorder %s10, 1
      %p27 = por %p25, %p26
      %p28 = scmp.ne.s32.totalorder %s20, %s23
      %p29 = scmp.eq.s32.totalorder %s10, 0
      %p30 = por %p28, %p29
      %p31 = scmp.ne.s32.totalorder %s20, %s23
      %p32 = scmp.eq.s32.totalorder %s15, 1
      %p33 = por %p31, %p32
      %p34 = scmp.ne.s32.totalorder %s23, %s24
      %p35 = scmp.eq.s32.totalorder %s15, 0
      %p36 = por %p34, %p35
      %p37 = scmp.ne.s32.totalorder %s23, %s24
      %p38 = scmp.eq.s32.totalorder %s16, 1
      %p39 = por %p37, %p38
      %p41 = scmp.ne.s32.totalorder %s24, %s40
      %p42 = scmp.eq.s32.totalorder %s16, 0
      %p43 = por %p41, %p42
      %s45 = sadd.s32 %s44, 1
      %p48 = scmp.eq.s32.totalorder %s10, 1
      %p49 = scmp.ne.s32.totalorder %s44, %s46
      %p50 = scmp.eq.s32.totalorder %s10, 0
      %p51 = por %p49, %p50
      %p52 = scmp.ne.s32.totalorder %s44, %s46
      %p53 = scmp.eq.s32.totalorder %s15, 1
      %p54 = por %p52, %p53
      %p55 = scmp.ne.s32.totalorder %s46, %s47
      %p56 = scmp.eq.s32.totalorder %s15, 0
      %p57 = por %p55, %p56
      %p58 = scmp.ne.s32.totalorder %s46, %s47
      %p59 = scmp.eq.s32.totalorder %s16, 1
      %p60 = por %p58, %p59
      %p62 = scmp.ne.s32.totalorder %s47, %s61
      %p63 = scmp.eq.s32.totalorder %s16, 0
      %p64 = por %p62, %p63
      %s66 = sadd.s32 %s65, 1
      %p69 = scmp.eq.s32.totalorder %s10, 1
      %p70 = scmp.ne.s32.totalorder %s65, %s67
      %p71 = scmp.eq.s32.totalorder %s10, 0
      %p72 = por %p70, %p71
      %p73 = scmp.ne.s32.totalorder %s65, %s67
      %p74 = scmp.eq.s32.totalorder %s15, 1
      %p75 = por %p73, %p74
      %p76 = scmp.ne.s32.totalorder %s67, %s68
      %p77 = scmp.eq.s32.totalorder %s15, 0
      %p78 = por %p76, %p77
      %p79 = scmp.ne.s32.totalorder %s67, %s68
      %p80 = scmp.eq.s32.totalorder %s16, 1
      %p81 = por %p79, %p80
      %p83 = scmp.ne.s32.totalorder %s68, %s82
      %p84 = scmp.eq.s32.totalorder %s16, 0
      %p85 = por %p83, %p84
      %s86 = ssub.s32 %s10, %s17
      %p87 = scmp.eq.s32.totalorder %s86, 0
      %s89 = sadd.s32 %s88, 1
      %s90 = scalar_select %p87, %s88, %s89
      %p93 = pneg %p87
      %p94 = scmp.eq.s32.totalorder %s10, 1
      %p95 = por %p93, %p94
      %p96 = scmp.ne.s32.totalorder %s88, %s91
      %p97 = scmp.eq.s32.totalorder %s10, 0
      %p98 = por %p96, %p97
      %p99 = scmp.ne.s32.totalorder %s88, %s91
      %p100 = scmp.eq.s32.totalorder %s15, 1
      %p101 = por %p99, %p100
      %p102 = scmp.ne.s32.totalorder %s91, %s92
      %p103 = scmp.eq.s32.totalorder %s15, 0
      %p104 = por %p102, %p103
      %p105 = scmp.ne.s32.totalorder %s91, %s92
      %p106 = scmp.eq.s32.totalorder %s16, 1
      %p107 = por %p105, %p106
      %p109 = scmp.ne.s32.totalorder %s92, %s108
      %p110 = scmp.eq.s32.totalorder %s16, 0
      %p111 = por %p109, %p110
      %p112 = scmp.le.s32.totalorder 1, %s10
      %p113 = scmp.lt.s32.totalorder %s10, 3
      %p114 = pnand %p112, %p113
      %p115 = pneg %p114
      // Predicated region
      $region9: #{upsample_forward_nhwc.1} parent=5 // pred_check
        _
      $region10: #{upsample_forward_nhwc.1} parent=5 // pred_check_branch
        %117 = sbr.rel (%p114) target = $region12
      $region11: #{upsample_forward_nhwc.1} parent=5 // pred_region
        %s118 = ssub.s32 %s10, 1
        // Predicated region
        $region13: #{upsample_forward_nhwc.1} parent=11 // pred_check
          %p119 = pneg %p57
        $region14: #{upsample_forward_nhwc.1} parent=11 // pred_check_branch
          %121 = sbr.rel (%p119) target = $region16
        $region15: #{upsample_forward_nhwc.1} parent=11 // pred_region
          _
        $region16: #{upsample_forward_nhwc.1} parent=11 // pred_fallthru
          _
        // Predicated region
        $region17: #{upsample_forward_nhwc.1} parent=11 // pred_check
          %p122 = pneg %p78
        $region18: #{upsample_forward_nhwc.1} parent=11 // pred_check_branch
          %124 = sbr.rel (%p122) target = $region20
        $region19: #{upsample_forward_nhwc.1} parent=11 // pred_region
          %126 = vsyncadd [#allocation3], 0
          %s127 = sshll.u32 %s2, 4
          %s128 = int_to_ptr.hbm [resolvable:$true] %s127
          %s129 = sshll.u32 [#allocation2], 4
          %s130 = int_to_ptr.vmem [resolvable:$true] %s129
          %135 = dma.hbm_to_vmem [thread:$0]  %s128, 12288, %s130, [#allocation3], 256, 256, 16
        $region20: #{upsample_forward_nhwc.1} parent=11 // pred_fallthru
          _
      $region12: #{upsample_forward_nhwc.1} parent=5 // pred_fallthru
        _
      %p136 = scmp.lt.s32.totalorder %s10, 2
      // Predicated region
      $region21: #{upsample_forward_nhwc.1} parent=5 // pred_check
        %p137 = pneg %p136
      $region22: #{upsample_forward_nhwc.1} parent=5 // pred_check_branch
        %139 = sbr.rel (%p137) target = $region24
      $region23: #{upsample_forward_nhwc.1} parent=5 // pred_region
        // Predicated region
        $region25: #{upsample_forward_nhwc.1} parent=23 // pred_check
          %p140 = pneg %p30
        $region26: #{upsample_forward_nhwc.1} parent=23 // pred_check_branch
          %142 = sbr.rel (%p140) target = $region28
        $region27: #{upsample_forward_nhwc.1} parent=23 // pred_region
          %p143 = scmp.lt.s32.totalorder %s10, 1
          %s144 = scalar_select %p143, %s10, 1
          %s145 = smul.addr %s144, 6
          %s146 = smul.addr %s145, 8
          %s147 = scalar_lea.vmem %s0, %s146
        $region28: #{upsample_forward_nhwc.1} parent=23 // pred_fallthru
          _
      $region24: #{upsample_forward_nhwc.1} parent=5 // pred_fallthru
        _
      %p148 = scmp.le.s32.totalorder 1, %s10
      %p149 = scmp.lt.s32.totalorder %s10, 3
      %p150 = pnand %p148, %p149
      %p151 = pneg %p150
      // Predicated region
      $region29: #{upsample_forward_nhwc.1} parent=5 // pred_check
        _
      $region30: #{upsample_forward_nhwc.1} parent=5 // pred_check_branch
        %153 = sbr.rel (%p150) target = $region32
      $region31: #{upsample_forward_nhwc.1} parent=5 // pred_region
        %s154 = ssub.s32 %s10, 1
        // Predicated region
        $region33: #{upsample_forward_nhwc.1} parent=31 // pred_check
          %p155 = pneg %p78
        $region34: #{upsample_forward_nhwc.1} parent=31 // pred_check_branch
          %157 = sbr.rel (%p155) target = $region36
        $region35: #{upsample_forward_nhwc.1} parent=31 // pred_region
          %159 = dma.done [#allocation3], 12288
        $region36: #{upsample_forward_nhwc.1} parent=31 // pred_fallthru
          _
        %p160 = scmp.lt.s32.totalorder %s15, 1
        %s161 = scalar_select %p160, %s15, 1
        %s162 = smul.addr %s161, 6
        %s163 = smul.addr %s162, 8
        %s164 = scalar_lea.vmem %s0, %s163
        %p165 = pneg %p36
        %p166 = pneg %p33
        %p167 = pneg %p57
        %p168 = pneg %p54
        %p169 = pneg %p78
        %p170 = pneg %p75
        %p171 = pneg %p104
        %p172 = pneg %p101
        %p173 = scmp.lt.s32.totalorder %s15, 1
        %s174 = scalar_select %p173, %s15, 1
        %s175 = smul.addr %s174, 16
        %s176 = smul.addr %s175, 8
        %s177 = scalar_lea.vmem %s3, %s176
        %p178 = scmp.lt.s32.totalorder %s15, 1
        %s179 = scalar_select %p178, %s15, 1
        %s180 = smul.addr %s179, 6
        %s181 = smul.addr %s180, 8
        %s182 = scalar_lea.vmem %s0, %s181
        %p183 = scmp.lt.s32.totalorder %s15, 1
        %s184 = scalar_select %p183, %s15, 1
        %s185 = smul.addr %s184, 16
        %s186 = smul.addr %s185, 8
        %s187 = scalar_lea.vmem %s3, %s186
        %v189 = vld [vmem:[%s182] sm:$0xff]
        %v190 = vld [vmem:[%s182 + $0x8] sm:$0xff]
        %v191 = vld [vmem:[%s182 + $0x10] sm:$0xff]
        %v192 = vld [vmem:[%s182 + $0x18] sm:$0xff]
        %v193 = vld [vmem:[%s182 + $0x20] sm:$0xff]
        %v194 = vld [vmem:[%s182 + $0x28] sm:$0xff]
        %v195 = vpack.c.bf16 %v192, %v189
        %v196 = vpack.c.bf16 %v193, %v190
        %v197 = vpack.c.bf16 %v194, %v191
        %v198 = vld [vmem:[#allocation2] sm:$0xff]
        %v199 = vld [vmem:[#allocation2 + $0x8] sm:$0xff]
        %v200 = vld [vmem:[#allocation2 + $0x10] sm:$0xff]
        %v201 = vld [vmem:[#allocation2 + $0x18] sm:$0xff]
        %v202 = vld [vmem:[#allocation2 + $0x20] sm:$0xff]
        %v203 = vld [vmem:[#allocation2 + $0x28] sm:$0xff]
        %v204 = vld [vmem:[#allocation2 + $0x30] sm:$0xff]
        %v205 = vld [vmem:[#allocation2 + $0x38] sm:$0xff]
        %v206 = vld [vmem:[#allocation2 + $0x40] sm:$0xff]
        %v207 = vld [vmem:[#allocation2 + $0x48] sm:$0xff]
        %v208 = vld [vmem:[#allocation2 + $0x50] sm:$0xff]
        %v209 = vld [vmem:[#allocation2 + $0x58] sm:$0xff]
        %v210 = vld [vmem:[#allocation2 + $0x60] sm:$0xff]
        %v211 = vld [vmem:[#allocation2 + $0x68] sm:$0xff]
        %v212 = vld [vmem:[#allocation2 + $0x70] sm:$0xff]
        %v213 = vld [vmem:[#allocation2 + $0x78] sm:$0xff]
        %v214 = vld [vmem:[#allocation2 + $0x80] sm:$0xff]
        %v215 = vld [vmem:[#allocation2 + $0x88] sm:$0xff]
        %v216 = vld [vmem:[#allocation2 + $0x90] sm:$0xff]
        %v217 = vld [vmem:[#allocation2 + $0x98] sm:$0xff]
        %v218 = vld [vmem:[#allocation2 + $0xa0] sm:$0xff]
        %v219 = vld [vmem:[#allocation2 + $0xa8] sm:$0xff]
        %v220 = vld [vmem:[#allocation2 + $0xb0] sm:$0xff]
        %v221 = vld [vmem:[#allocation2 + $0xb8] sm:$0xff]
        %v222 = vld [vmem:[#allocation2 + $0xc0] sm:$0xff]
        %v223 = vld [vmem:[#allocation2 + $0xc8] sm:$0xff]
        %v224 = vld [vmem:[#allocation2 + $0xd0] sm:$0xff]
        %v225 = vld [vmem:[#allocation2 + $0xd8] sm:$0xff]
        %v226 = vld [vmem:[#allocation2 + $0xe0] sm:$0xff]
        %v227 = vld [vmem:[#allocation2 + $0xe8] sm:$0xff]
        %v228 = vld [vmem:[#allocation2 + $0xf0] sm:$0xff]
        %v229 = vld [vmem:[#allocation2 + $0xf8] sm:$0xff]
        %v230 = vld [vmem:[#allocation2 + $0x100] sm:$0xff]
        %v231 = vld [vmem:[#allocation2 + $0x108] sm:$0xff]
        %v232 = vld [vmem:[#allocation2 + $0x110] sm:$0xff]
        %v233 = vld [vmem:[#allocation2 + $0x118] sm:$0xff]
        %v234 = vld [vmem:[#allocation2 + $0x120] sm:$0xff]
        %v235 = vld [vmem:[#allocation2 + $0x128] sm:$0xff]
        %v236 = vld [vmem:[#allocation2 + $0x130] sm:$0xff]
        %v237 = vld [vmem:[#allocation2 + $0x138] sm:$0xff]
        %v238 = vld [vmem:[#allocation2 + $0x140] sm:$0xff]
        %v239 = vld [vmem:[#allocation2 + $0x148] sm:$0xff]
        %v240 = vld [vmem:[#allocation2 + $0x150] sm:$0xff]
        %v241 = vld [vmem:[#allocation2 + $0x158] sm:$0xff]
        %v242 = vld [vmem:[#allocation2 + $0x160] sm:$0xff]
        %v243 = vld [vmem:[#allocation2 + $0x168] sm:$0xff]
        %v244 = vld [vmem:[#allocation2 + $0x170] sm:$0xff]
        %v245 = vld [vmem:[#allocation2 + $0x178] sm:$0xff]
        %v246 = vld [vmem:[#allocation2 + $0x180] sm:$0xff]
        %v247 = vld [vmem:[#allocation2 + $0x188] sm:$0xff]
        %v248 = vld [vmem:[#allocation2 + $0x190] sm:$0xff]
        %v249 = vld [vmem:[#allocation2 + $0x198] sm:$0xff]
        %v250 = vld [vmem:[#allocation2 + $0x1a0] sm:$0xff]
        %v251 = vld [vmem:[#allocation2 + $0x1a8] sm:$0xff]
        %v252 = vld [vmem:[#allocation2 + $0x1b0] sm:$0xff]
        %v253 = vld [vmem:[#allocation2 + $0x1b8] sm:$0xff]
        %v254 = vld [vmem:[#allocation2 + $0x1c0] sm:$0xff]
        %v255 = vld [vmem:[#allocation2 + $0x1c8] sm:$0xff]
        %v256 = vld [vmem:[#allocation2 + $0x1d0] sm:$0xff]
        %v257 = vld [vmem:[#allocation2 + $0x1d8] sm:$0xff]
        %v258 = vld [vmem:[#allocation2 + $0x1e0] sm:$0xff]
        %v259 = vld [vmem:[#allocation2 + $0x1e8] sm:$0xff]
        %v260 = vld [vmem:[#allocation2 + $0x1f0] sm:$0xff]
        %v261 = vld [vmem:[#allocation2 + $0x1f8] sm:$0xff]
        %v262 = vld [vmem:[#allocation2 + $0x200] sm:$0xff]
        %v263 = vld [vmem:[#allocation2 + $0x208] sm:$0xff]
        %v264 = vld [vmem:[#allocation2 + $0x210] sm:$0xff]
        %v265 = vld [vmem:[#allocation2 + $0x218] sm:$0xff]
        %v266 = vld [vmem:[#allocation2 + $0x220] sm:$0xff]
        %v267 = vld [vmem:[#allocation2 + $0x228] sm:$0xff]
        %v268 = vld [vmem:[#allocation2 + $0x230] sm:$0xff]
        %v269 = vld [vmem:[#allocation2 + $0x238] sm:$0xff]
        %v270 = vld [vmem:[#allocation2 + $0x240] sm:$0xff]
        %v271 = vld [vmem:[#allocation2 + $0x248] sm:$0xff]
        %v272 = vld [vmem:[#allocation2 + $0x250] sm:$0xff]
        %v273 = vld [vmem:[#allocation2 + $0x258] sm:$0xff]
        %v274 = vld [vmem:[#allocation2 + $0x260] sm:$0xff]
        %v275 = vld [vmem:[#allocation2 + $0x268] sm:$0xff]
        %v276 = vld [vmem:[#allocation2 + $0x270] sm:$0xff]
        %v277 = vld [vmem:[#allocation2 + $0x278] sm:$0xff]
        %v278 = vld [vmem:[#allocation2 + $0x280] sm:$0xff]
        %v279 = vld [vmem:[#allocation2 + $0x288] sm:$0xff]
        %v280 = vld [vmem:[#allocation2 + $0x290] sm:$0xff]
        %v281 = vld [vmem:[#allocation2 + $0x298] sm:$0xff]
        %v282 = vld [vmem:[#allocation2 + $0x2a0] sm:$0xff]
        %v283 = vld [vmem:[#allocation2 + $0x2a8] sm:$0xff]
        %v284 = vld [vmem:[#allocation2 + $0x2b0] sm:$0xff]
        %v285 = vld [vmem:[#allocation2 + $0x2b8] sm:$0xff]
        %v286 = vld [vmem:[#allocation2 + $0x2c0] sm:$0xff]
        %v287 = vld [vmem:[#allocation2 + $0x2c8] sm:$0xff]
        %v288 = vld [vmem:[#allocation2 + $0x2d0] sm:$0xff]
        %v289 = vld [vmem:[#allocation2 + $0x2d8] sm:$0xff]
        %v290 = vld [vmem:[#allocation2 + $0x2e0] sm:$0xff]
        %v291 = vld [vmem:[#allocation2 + $0x2e8] sm:$0xff]
        %v292 = vld [vmem:[#allocation2 + $0x2f0] sm:$0xff]
        %v293 = vld [vmem:[#allocation2 + $0x2f8] sm:$0xff]
        %v390 = vunpack.c.l.b16 %v198
        %v391 = vunpack.c.h.b16 %v198
        %v392 = vunpack.c.l.b16 %v199
        %v393 = vunpack.c.h.b16 %v199
        %v394 = vunpack.c.l.b16 %v200
        %v395 = vunpack.c.h.b16 %v200
        %v396 = vunpack.c.l.b16 %v201
        %v397 = vunpack.c.h.b16 %v201
        %v398 = vunpack.c.l.b16 %v202
        %v399 = vunpack.c.h.b16 %v202
        %v400 = vunpack.c.l.b16 %v203
        %v401 = vunpack.c.h.b16 %v203
        %v402 = vunpack.c.l.b16 %v204
        %v403 = vunpack.c.h.b16 %v204
        %v404 = vunpack.c.l.b16 %v205
        %v405 = vunpack.c.h.b16 %v205
        %v406 = vunpack.c.l.b16 %v206
        %v407 = vunpack.c.h.b16 %v206
        %v408 = vunpack.c.l.b16 %v207
        %v409 = vunpack.c.h.b16 %v207
        %v410 = vunpack.c.l.b16 %v208
        %v411 = vunpack.c.h.b16 %v208
        %v412 = vunpack.c.l.b16 %v209
        %v413 = vunpack.c.h.b16 %v209
        %v414 = vunpack.c.l.b16 %v210
        %v415 = vunpack.c.h.b16 %v210
        %v416 = vunpack.c.l.b16 %v211
        %v417 = vunpack.c.h.b16 %v211
        %v418 = vunpack.c.l.b16 %v212
        %v419 = vunpack.c.h.b16 %v212
        %v420 = vunpack.c.l.b16 %v213
        %v421 = vunpack.c.h.b16 %v213
        %v422 = vunpack.c.l.b16 %v214
        %v423 = vunpack.c.h.b16 %v214
        %v424 = vunpack.c.l.b16 %v215
        %v425 = vunpack.c.h.b16 %v215
        %v426 = vunpack.c.l.b16 %v216
        %v427 = vunpack.c.h.b16 %v216
        %v428 = vunpack.c.l.b16 %v217
        %v429 = vunpack.c.h.b16 %v217
        %v430 = vunpack.c.l.b16 %v218
        %v431 = vunpack.c.h.b16 %v218
        %v432 = vunpack.c.l.b16 %v219
        %v433 = vunpack.c.h.b16 %v219
        %v434 = vunpack.c.l.b16 %v220
        %v435 = vunpack.c.h.b16 %v220
        %v436 = vunpack.c.l.b16 %v221
        %v437 = vunpack.c.h.b16 %v221
        %v438 = vunpack.c.l.b16 %v222
        %v439 = vunpack.c.h.b16 %v222
        %v440 = vunpack.c.l.b16 %v223
        %v441 = vunpack.c.h.b16 %v223
        %v442 = vunpack.c.l.b16 %v224
        %v443 = vunpack.c.h.b16 %v224
        %v444 = vunpack.c.l.b16 %v225
        %v445 = vunpack.c.h.b16 %v225
        %v446 = vunpack.c.l.b16 %v226
        %v447 = vunpack.c.h.b16 %v226
        %v448 = vunpack.c.l.b16 %v227
        %v449 = vunpack.c.h.b16 %v227
        %v450 = vunpack.c.l.b16 %v228
        %v451 = vunpack.c.h.b16 %v228
        %v452 = vunpack.c.l.b16 %v229
        %v453 = vunpack.c.h.b16 %v229
        %v454 = vunpack.c.l.b16 %v230
        %v455 = vunpack.c.h.b16 %v230
        %v456 = vunpack.c.l.b16 %v231
        %v457 = vunpack.c.h.b16 %v231
        %v458 = vunpack.c.l.b16 %v232
        %v459 = vunpack.c.h.b16 %v232
        %v460 = vunpack.c.l.b16 %v233
        %v461 = vunpack.c.h.b16 %v233
        %v462 = vunpack.c.l.b16 %v234
        %v463 = vunpack.c.h.b16 %v234
        %v464 = vunpack.c.l.b16 %v235
        %v465 = vunpack.c.h.b16 %v235
        %v466 = vunpack.c.l.b16 %v236
        %v467 = vunpack.c.h.b16 %v236
        %v468 = vunpack.c.l.b16 %v237
        %v469 = vunpack.c.h.b16 %v237
        %v470 = vunpack.c.l.b16 %v238
        %v471 = vunpack.c.h.b16 %v238
        %v472 = vunpack.c.l.b16 %v239
        %v473 = vunpack.c.h.b16 %v239
        %v474 = vunpack.c.l.b16 %v240
        %v475 = vunpack.c.h.b16 %v240
        %v476 = vunpack.c.l.b16 %v241
        %v477 = vunpack.c.h.b16 %v241
        %v478 = vunpack.c.l.b16 %v242
        %v479 = vunpack.c.h.b16 %v242
        %v480 = vunpack.c.l.b16 %v243
        %v481 = vunpack.c.h.b16 %v243
        %v482 = vunpack.c.l.b16 %v244
        %v483 = vunpack.c.h.b16 %v244
        %v484 = vunpack.c.l.b16 %v245
        %v485 = vunpack.c.h.b16 %v245
        %v486 = vunpack.c.l.b16 %v246
        %v487 = vunpack.c.h.b16 %v246
        %v488 = vunpack.c.l.b16 %v247
        %v489 = vunpack.c.h.b16 %v247
        %v490 = vunpack.c.l.b16 %v248
        %v491 = vunpack.c.h.b16 %v248
        %v492 = vunpack.c.l.b16 %v249
        %v493 = vunpack.c.h.b16 %v249
        %v494 = vunpack.c.l.b16 %v250
        %v495 = vunpack.c.h.b16 %v250
        %v496 = vunpack.c.l.b16 %v251
        %v497 = vunpack.c.h.b16 %v251
        %v498 = vunpack.c.l.b16 %v252
        %v499 = vunpack.c.h.b16 %v252
        %v500 = vunpack.c.l.b16 %v253
        %v501 = vunpack.c.h.b16 %v253
        %v502 = vunpack.c.l.b16 %v254
        %v503 = vunpack.c.h.b16 %v254
        %v504 = vunpack.c.l.b16 %v255
        %v505 = vunpack.c.h.b16 %v255
        %v506 = vunpack.c.l.b16 %v256
        %v507 = vunpack.c.h.b16 %v256
        %v508 = vunpack.c.l.b16 %v257
        %v509 = vunpack.c.h.b16 %v257
        %v510 = vunpack.c.l.b16 %v258
        %v511 = vunpack.c.h.b16 %v258
        %v512 = vunpack.c.l.b16 %v259
        %v513 = vunpack.c.h.b16 %v259
        %v514 = vunpack.c.l.b16 %v260
        %v515 = vunpack.c.h.b16 %v260
        %v516 = vunpack.c.l.b16 %v261
        %v517 = vunpack.c.h.b16 %v261
        %v518 = vunpack.c.l.b16 %v262
        %v519 = vunpack.c.h.b16 %v262
        %v520 = vunpack.c.l.b16 %v263
        %v521 = vunpack.c.h.b16 %v263
        %v522 = vunpack.c.l.b16 %v264
        %v523 = vunpack.c.h.b16 %v264
        %v524 = vunpack.c.l.b16 %v265
        %v525 = vunpack.c.h.b16 %v265
        %v526 = vunpack.c.l.b16 %v266
        %v527 = vunpack.c.h.b16 %v266
        %v528 = vunpack.c.l.b16 %v267
        %v529 = vunpack.c.h.b16 %v267
        %v530 = vunpack.c.l.b16 %v268
        %v531 = vunpack.c.h.b16 %v268
        %v532 = vunpack.c.l.b16 %v269
        %v533 = vunpack.c.h.b16 %v269
        %v534 = vunpack.c.l.b16 %v270
        %v535 = vunpack.c.h.b16 %v270
        %v536 = vunpack.c.l.b16 %v271
        %v537 = vunpack.c.h.b16 %v271
        %v538 = vunpack.c.l.b16 %v272
        %v539 = vunpack.c.h.b16 %v272
        %v540 = vunpack.c.l.b16 %v273
        %v541 = vunpack.c.h.b16 %v273
        %v542 = vunpack.c.l.b16 %v274
        %v543 = vunpack.c.h.b16 %v274
        %v544 = vunpack.c.l.b16 %v275
        %v545 = vunpack.c.h.b16 %v275
        %v546 = vunpack.c.l.b16 %v276
        %v547 = vunpack.c.h.b16 %v276
        %v548 = vunpack.c.l.b16 %v277
        %v549 = vunpack.c.h.b16 %v277
        %v550 = vunpack.c.l.b16 %v278
        %v551 = vunpack.c.h.b16 %v278
        %v552 = vunpack.c.l.b16 %v279
        %v553 = vunpack.c.h.b16 %v279
        %v554 = vunpack.c.l.b16 %v280
        %v555 = vunpack.c.h.b16 %v280
        %v556 = vunpack.c.l.b16 %v281
        %v557 = vunpack.c.h.b16 %v281
        %v558 = vunpack.c.l.b16 %v282
        %v559 = vunpack.c.h.b16 %v282
        %v560 = vunpack.c.l.b16 %v283
        %v561 = vunpack.c.h.b16 %v283
        %v562 = vunpack.c.l.b16 %v284
        %v563 = vunpack.c.h.b16 %v284
        %v564 = vunpack.c.l.b16 %v285
        %v565 = vunpack.c.h.b16 %v285
        %v566 = vunpack.c.l.b16 %v286
        %v567 = vunpack.c.h.b16 %v286
        %v568 = vunpack.c.l.b16 %v287
        %v569 = vunpack.c.h.b16 %v287
        %v570 = vunpack.c.l.b16 %v288
        %v571 = vunpack.c.h.b16 %v288
        %v572 = vunpack.c.l.b16 %v289
        %v573 = vunpack.c.h.b16 %v289
        %v574 = vunpack.c.l.b16 %v290
        %v575 = vunpack.c.h.b16 %v290
        %v576 = vunpack.c.l.b16 %v291
        %v577 = vunpack.c.h.b16 %v291
        %v578 = vunpack.c.l.b16 %v292
        %v579 = vunpack.c.h.b16 %v292
        %v580 = vunpack.c.l.b16 %v293
        %v581 = vunpack.c.h.b16 %v293
        %v582 = vpack.c.b16 %v394, %v390
        %v583 = vpack.c.b16 %v395, %v391
        %v584 = vpack.c.b16 %v396, %v392
        %v585 = vpack.c.b16 %v397, %v393
        %v586 = vpack.c.b16 %v402, %v398
        %v587 = vpack.c.b16 %v403, %v399
        %v588 = vpack.c.b16 %v404, %v400
        %v589 = vpack.c.b16 %v405, %v401
        %v590 = vpack.c.b16 %v410, %v406
        %v591 = vpack.c.b16 %v411, %v407
        %v592 = vpack.c.b16 %v412, %v408
        %v593 = vpack.c.b16 %v413, %v409
        %v594 = vpack.c.b16 %v418, %v414
        %v595 = vpack.c.b16 %v419, %v415
        %v596 = vpack.c.b16 %v420, %v416
        %v597 = vpack.c.b16 %v421, %v417
        %v598 = vpack.c.b16 %v426, %v422
        %v599 = vpack.c.b16 %v427, %v423
        %v600 = vpack.c.b16 %v428, %v424
        %v601 = vpack.c.b16 %v429, %v425
        %v602 = vpack.c.b16 %v434, %v430
        %v603 = vpack.c.b16 %v435, %v431
        %v604 = vpack.c.b16 %v436, %v432
        %v605 = vpack.c.b16 %v437, %v433
        %v606 = vpack.c.b16 %v442, %v438
        %v607 = vpack.c.b16 %v443, %v439
        %v608 = vpack.c.b16 %v444, %v440
        %v609 = vpack.c.b16 %v445, %v441
        %v610 = vpack.c.b16 %v450, %v446
        %v611 = vpack.c.b16 %v451, %v447
        %v612 = vpack.c.b16 %v452, %v448
        %v613 = vpack.c.b16 %v453, %v449
        %v614 = vpack.c.b16 %v458, %v454
        %v615 = vpack.c.b16 %v459, %v455
        %v616 = vpack.c.b16 %v460, %v456
        %v617 = vpack.c.b16 %v461, %v457
        %v618 = vpack.c.b16 %v466, %v462
        %v619 = vpack.c.b16 %v467, %v463
        %v620 = vpack.c.b16 %v468, %v464
        %v621 = vpack.c.b16 %v469, %v465
        %v622 = vpack.c.b16 %v474, %v470
        %v623 = vpack.c.b16 %v475, %v471
        %v624 = vpack.c.b16 %v476, %v472
        %v625 = vpack.c.b16 %v477, %v473
        %v626 = vpack.c.b16 %v482, %v478
        %v627 = vpack.c.b16 %v483, %v479
        %v628 = vpack.c.b16 %v484, %v480
        %v629 = vpack.c.b16 %v485, %v481
        %v630 = vpack.c.b16 %v490, %v486
        %v631 = vpack.c.b16 %v491, %v487
        %v632 = vpack.c.b16 %v492, %v488
        %v633 = vpack.c.b16 %v493, %v489
        %v634 = vpack.c.b16 %v498, %v494
        %v635 = vpack.c.b16 %v499, %v495
        %v636 = vpack.c.b16 %v500, %v496
        %v637 = vpack.c.b16 %v501, %v497
        %v638 = vpack.c.b16 %v506, %v502
        %v639 = vpack.c.b16 %v507, %v503
        %v640 = vpack.c.b16 %v508, %v504
        %v641 = vpack.c.b16 %v509, %v505
        %v642 = vpack.c.b16 %v514, %v510
        %v643 = vpack.c.b16 %v515, %v511
        %v644 = vpack.c.b16 %v516, %v512
        %v645 = vpack.c.b16 %v517, %v513
        %v646 = vpack.c.b16 %v522, %v518
        %v647 = vpack.c.b16 %v523, %v519
        %v648 = vpack.c.b16 %v524, %v520
        %v649 = vpack.c.b16 %v525, %v521
        %v650 = vpack.c.b16 %v530, %v526
        %v651 = vpack.c.b16 %v531, %v527
        %v652 = vpack.c.b16 %v532, %v528
        %v653 = vpack.c.b16 %v533, %v529
        %v654 = vpack.c.b16 %v538, %v534
        %v655 = vpack.c.b16 %v539, %v535
        %v656 = vpack.c.b16 %v540, %v536
        %v657 = vpack.c.b16 %v541, %v537
        %v658 = vpack.c.b16 %v546, %v542
        %v659 = vpack.c.b16 %v547, %v543
        %v660 = vpack.c.b16 %v548, %v544
        %v661 = vpack.c.b16 %v549, %v545
        %v662 = vpack.c.b16 %v554, %v550
        %v663 = vpack.c.b16 %v555, %v551
        %v664 = vpack.c.b16 %v556, %v552
        %v665 = vpack.c.b16 %v557, %v553
        %v666 = vpack.c.b16 %v562, %v558
        %v667 = vpack.c.b16 %v563, %v559
        %v668 = vpack.c.b16 %v564, %v560
        %v669 = vpack.c.b16 %v565, %v561
        %v670 = vpack.c.b16 %v570, %v566
        %v671 = vpack.c.b16 %v571, %v567
        %v672 = vpack.c.b16 %v572, %v568
        %v673 = vpack.c.b16 %v573, %v569
        %v674 = vpack.c.b16 %v578, %v574
        %v675 = vpack.c.b16 %v579, %v575
        %v676 = vpack.c.b16 %v580, %v576
        %v677 = vpack.c.b16 %v581, %v577
        %774 = vmatpush.bf16.msra.mxu0 %v610
        %775 = vmatpush.bf16.msra.mxu0 %v606
        %776 = vmatpush.bf16.msra.mxu0 %v602
        %777 = vmatpush.bf16.msra.mxu0 %v598
        %778 = vmatpush.bf16.msra.mxu0 %v594
        %779 = vmatpush.bf16.msra.mxu0 %v590
        %780 = vmatpush.bf16.msra.mxu0 %v586
        %781 = vmatpush.bf16.msra.mxu0 %v582
        %782 = vmatmul.bf16.gmra.mxu0 %v195
        %v783 = vpop.f32.mrf.mxu0
        %v784 = vadd.f32 0.0, %v783
        %v785 = vpop.f32.mrf.mxu0
        %v786 = vadd.f32 0.0, %v785
        %787 = vdwg.mxu0
        %788 = vmatpush.bf16.msra.mxu0 %v642
        %789 = vmatpush.bf16.msra.mxu0 %v638
        %790 = vmatpush.bf16.msra.mxu0 %v634
        %791 = vmatpush.bf16.msra.mxu0 %v630
        %792 = vmatpush.bf16.msra.mxu0 %v626
        %793 = vmatpush.bf16.msra.mxu0 %v622
        %794 = vmatpush.bf16.msra.mxu0 %v618
        %795 = vmatpush.bf16.msra.mxu0 %v614
        %796 = vmatmul.bf16.gmra.mxu0 %v196
        %v797 = vpop.f32.mrf.mxu0
        %v798 = vadd.f32 %v784, %v797
        %v799 = vpop.f32.mrf.mxu0
        %v800 = vadd.f32 %v786, %v799
        %801 = vdwg.mxu0
        %802 = vmatpush.bf16.msra.mxu0 %v674
        %803 = vmatpush.bf16.msra.mxu0 %v670
        %804 = vmatpush.bf16.msra.mxu0 %v666
        %805 = vmatpush.bf16.msra.mxu0 %v662
        %806 = vmatpush.bf16.msra.mxu0 %v658
        %807 = vmatpush.bf16.msra.mxu0 %v654
        %808 = vmatpush.bf16.msra.mxu0 %v650
        %809 = vmatpush.bf16.msra.mxu0 %v646
        %810 = vmatmul.bf16.gmra.mxu0 %v197
        %v811 = vpop.f32.mrf.mxu0
        %v812 = vadd.f32 %v798, %v811
        %v813 = vpop.f32.mrf.mxu0
        %v814 = vadd.f32 %v800, %v813
        %815 = vdwg.mxu0
        %816 = vmatpush.bf16.msra.mxu0 %v611
        %817 = vmatpush.bf16.msra.mxu0 %v607
        %818 = vmatpush.bf16.msra.mxu0 %v603
        %819 = vmatpush.bf16.msra.mxu0 %v599
        %820 = vmatpush.bf16.msra.mxu0 %v595
        %821 = vmatpush.bf16.msra.mxu0 %v591
        %822 = vmatpush.bf16.msra.mxu0 %v587
        %823 = vmatpush.bf16.msra.mxu0 %v583
        %824 = vmatmul.bf16.gmra.mxu0 %v195
        %v825 = vpop.f32.mrf.mxu0
        %v826 = vadd.f32 0.0, %v825
        %v827 = vpop.f32.mrf.mxu0
        %v828 = vadd.f32 0.0, %v827
        %829 = vdwg.mxu0
        %830 = vmatpush.bf16.msra.mxu0 %v643
        %831 = vmatpush.bf16.msra.mxu0 %v639
        %832 = vmatpush.bf16.msra.mxu0 %v635
        %833 = vmatpush.bf16.msra.mxu0 %v631
        %834 = vmatpush.bf16.msra.mxu0 %v627
        %835 = vmatpush.bf16.msra.mxu0 %v623
        %836 = vmatpush.bf16.msra.mxu0 %v619
        %837 = vmatpush.bf16.msra.mxu0 %v615
        %838 = vmatmul.bf16.gmra.mxu0 %v196
        %v839 = vpop.f32.mrf.mxu0
        %v840 = vadd.f32 %v826, %v839
        %v841 = vpop.f32.mrf.mxu0
        %v842 = vadd.f32 %v828, %v841
        %843 = vdwg.mxu0
        %844 = vmatpush.bf16.msra.mxu0 %v675
        %845 = vmatpush.bf16.msra.mxu0 %v671
        %846 = vmatpush.bf16.msra.mxu0 %v667
        %847 = vmatpush.bf16.msra.mxu0 %v663
        %848 = vmatpush.bf16.msra.mxu0 %v659
        %849 = vmatpush.bf16.msra.mxu0 %v655
        %850 = vmatpush.bf16.msra.mxu0 %v651
        %851 = vmatpush.bf16.msra.mxu0 %v647
        %852 = vmatmul.bf16.gmra.mxu0 %v197
        %v853 = vpop.f32.mrf.mxu0
        %v854 = vadd.f32 %v840, %v853
        %v855 = vpop.f32.mrf.mxu0
        %v856 = vadd.f32 %v842, %v855
        %857 = vdwg.mxu0
        %858 = vmatpush.bf16.msra.mxu0 %v612
        %859 = vmatpush.bf16.msra.mxu0 %v608
        %860 = vmatpush.bf16.msra.mxu0 %v604
        %861 = vmatpush.bf16.msra.mxu0 %v600
        %862 = vmatpush.bf16.msra.mxu0 %v596
        %863 = vmatpush.bf16.msra.mxu0 %v592
        %864 = vmatpush.bf16.msra.mxu0 %v588
        %865 = vmatpush.bf16.msra.mxu0 %v584
        %866 = vmatmul.bf16.gmra.mxu0 %v195
        %v867 = vpop.f32.mrf.mxu0
        %v868 = vadd.f32 0.0, %v867
        %v869 = vpop.f32.mrf.mxu0
        %v870 = vadd.f32 0.0, %v869
        %871 = vdwg.mxu0
        %872 = vmatpush.bf16.msra.mxu0 %v644
        %873 = vmatpush.bf16.msra.mxu0 %v640
        %874 = vmatpush.bf16.msra.mxu0 %v636
        %875 = vmatpush.bf16.msra.mxu0 %v632
        %876 = vmatpush.bf16.msra.mxu0 %v628
        %877 = vmatpush.bf16.msra.mxu0 %v624
        %878 = vmatpush.bf16.msra.mxu0 %v620
        %879 = vmatpush.bf16.msra.mxu0 %v616
        %880 = vmatmul.bf16.gmra.mxu0 %v196
        %v881 = vpop.f32.mrf.mxu0
        %v882 = vadd.f32 %v868, %v881
        %v883 = vpop.f32.mrf.mxu0
        %v884 = vadd.f32 %v870, %v883
        %885 = vdwg.mxu0
        %886 = vmatpush.bf16.msra.mxu0 %v676
        %887 = vmatpush.bf16.msra.mxu0 %v672
        %888 = vmatpush.bf16.msra.mxu0 %v668
        %889 = vmatpush.bf16.msra.mxu0 %v664
        %890 = vmatpush.bf16.msra.mxu0 %v660
        %891 = vmatpush.bf16.msra.mxu0 %v656
        %892 = vmatpush.bf16.msra.mxu0 %v652
        %893 = vmatpush.bf16.msra.mxu0 %v648
        %894 = vmatmul.bf16.gmra.mxu0 %v197
        %v895 = vpop.f32.mrf.mxu0
        %v896 = vadd.f32 %v882, %v895
        %v897 = vpop.f32.mrf.mxu0
        %v898 = vadd.f32 %v884, %v897
        %899 = vdwg.mxu0
        %900 = vmatpush.bf16.msra.mxu0 %v613
        %901 = vmatpush.bf16.msra.mxu0 %v609
        %902 = vmatpush.bf16.msra.mxu0 %v605
        %903 = vmatpush.bf16.msra.mxu0 %v601
        %904 = vmatpush.bf16.msra.mxu0 %v597
        %905 = vmatpush.bf16.msra.mxu0 %v593
        %906 = vmatpush.bf16.msra.mxu0 %v589
        %907 = vmatpush.bf16.msra.mxu0 %v585
        %908 = vmatmul.bf16.gmra.mxu0 %v195
        %v909 = vpop.f32.mrf.mxu0
        %v910 = vadd.f32 0.0, %v909
        %v911 = vpop.f32.mrf.mxu0
        %v912 = vadd.f32 0.0, %v911
        %913 = vdwg.mxu0
        %914 = vmatpush.bf16.msra.mxu0 %v645
        %915 = vmatpush.bf16.msra.mxu0 %v641
        %916 = vmatpush.bf16.msra.mxu0 %v637
        %917 = vmatpush.bf16.msra.mxu0 %v633
        %918 = vmatpush.bf16.msra.mxu0 %v629
        %919 = vmatpush.bf16.msra.mxu0 %v625
        %920 = vmatpush.bf16.msra.mxu0 %v621
        %921 = vmatpush.bf16.msra.mxu0 %v617
        %922 = vmatmul.bf16.gmra.mxu0 %v196
        %v923 = vpop.f32.mrf.mxu0
        %v924 = vadd.f32 %v910, %v923
        %v925 = vpop.f32.mrf.mxu0
        %v926 = vadd.f32 %v912, %v925
        %927 = vdwg.mxu0
        %928 = vmatpush.bf16.msra.mxu0 %v677
        %929 = vmatpush.bf16.msra.mxu0 %v673
        %930 = vmatpush.bf16.msra.mxu0 %v669
        %931 = vmatpush.bf16.msra.mxu0 %v665
        %932 = vmatpush.bf16.msra.mxu0 %v661
        %933 = vmatpush.bf16.msra.mxu0 %v657
        %934 = vmatpush.bf16.msra.mxu0 %v653
        %935 = vmatpush.bf16.msra.mxu0 %v649
        %936 = vmatmul.bf16.gmra.mxu0 %v197
        %v937 = vpop.f32.mrf.mxu0
        %v938 = vadd.f32 %v924, %v937
        %v939 = vpop.f32.mrf.mxu0
        %v940 = vadd.f32 %v926, %v939
        %941 = vdwg.mxu0
        %v942 = vpack.c.bf16 %v854, %v812
        %v943 = vpack.c.bf16 %v938, %v896
        %v944 = vpack.c.bf16 %v856, %v814
        %v945 = vpack.c.bf16 %v940, %v898
        %v946 = vld [vmem:[%s1] sm:$0xf]
        %v947 = vld [vmem:[%s1 + $0x4] sm:$0xf]
        %v948 = vld [vmem:[%s1 + $0x8] sm:$0xf]
        %v949 = vld [vmem:[%s1 + $0xc] sm:$0xf]
        %v954 = vunpack.c.l.b16 %v946
        %v955 = vunpack.c.l.b16 %v947
        %v956 = vunpack.c.l.b16 %v948
        %v957 = vunpack.c.l.b16 %v949
        %v958 = vpack.c.b16 %v955, %v954
        %v959 = vpack.c.b16 %v957, %v956
        %v964 = vunpack.c.l.b16 %v942
        %v965 = vunpack.c.h.b16 %v942
        %v966 = vunpack.c.l.b16 %v943
        %v967 = vunpack.c.h.b16 %v943
        %v968 = vunpack.c.l.b16 %v944
        %v969 = vunpack.c.h.b16 %v944
        %v970 = vunpack.c.l.b16 %v945
        %v971 = vunpack.c.h.b16 %v945
        %v972 = vpack.c.b16 %v968, %v964
        %v973 = vpack.c.b16 %v969, %v965
        %v974 = vpack.c.b16 %v970, %v966
        %v975 = vpack.c.b16 %v971, %v967
        %vm980 = vcmask 130048
        %v982 = vsel %vm980, %v958, 0
        %v985 = vsel %vm980, %v959, 0
        %987 = vmatpush.bf16.msra.mxu0 0
        %988 = vmatpush.bf16.msra.mxu0 0
        %989 = vmatpush.bf16.msra.mxu0 0
        %990 = vmatpush.bf16.msra.mxu0 0
        %991 = vmatpush.bf16.msra.mxu0 0
        %992 = vmatpush.bf16.msra.mxu0 0
        %993 = vmatpush.bf16.msra.mxu0 0
        %994 = vmatpush.bf16.msra.mxu0 %v972
        %995 = vmatmul.bf16.gmra.mxu0 %v982
        %v996 = vpop.f32.mrf.mxu0
        %v997 = vadd.f32 0.0, %v996
        %v998 = vpop.f32.mrf.mxu0
        %v999 = vadd.f32 0.0, %v998
        %1000 = vmatmul.bf16.gmra.mxu0 %v985
        %v1001 = vpop.f32.mrf.mxu0
        %v1002 = vadd.f32 0.0, %v1001
        %v1003 = vpop.f32.mrf.mxu0
        %v1004 = vadd.f32 0.0, %v1003
        %1005 = vdwg.mxu0
        %1006 = vmatpush.bf16.msra.mxu0 0
        %1007 = vmatpush.bf16.msra.mxu0 0
        %1008 = vmatpush.bf16.msra.mxu0 0
        %1009 = vmatpush.bf16.msra.mxu0 0
        %1010 = vmatpush.bf16.msra.mxu0 0
        %1011 = vmatpush.bf16.msra.mxu0 0
        %1012 = vmatpush.bf16.msra.mxu0 0
        %1013 = vmatpush.bf16.msra.mxu0 %v973
        %1014 = vmatmul.bf16.gmra.mxu0 %v982
        %v1015 = vpop.f32.mrf.mxu0
        %v1016 = vadd.f32 0.0, %v1015
        %v1017 = vpop.f32.mrf.mxu0
        %v1018 = vadd.f32 0.0, %v1017
        %1019 = vmatmul.bf16.gmra.mxu0 %v985
        %v1020 = vpop.f32.mrf.mxu0
        %v1021 = vadd.f32 0.0, %v1020
        %v1022 = vpop.f32.mrf.mxu0
        %v1023 = vadd.f32 0.0, %v1022
        %1024 = vdwg.mxu0
        %1025 = vmatpush.bf16.msra.mxu0 0
        %1026 = vmatpush.bf16.msra.mxu0 0
        %1027 = vmatpush.bf16.msra.mxu0 0
        %1028 = vmatpush.bf16.msra.mxu0 0
        %1029 = vmatpush.bf16.msra.mxu0 0
        %1030 = vmatpush.bf16.msra.mxu0 0
        %1031 = vmatpush.bf16.msra.mxu0 0
        %1032 = vmatpush.bf16.msra.mxu0 %v974
        %1033 = vmatmul.bf16.gmra.mxu0 %v982
        %v1034 = vpop.f32.mrf.mxu0
        %v1035 = vadd.f32 0.0, %v1034
        %v1036 = vpop.f32.mrf.mxu0
        %v1037 = vadd.f32 0.0, %v1036
        %1038 = vmatmul.bf16.gmra.mxu0 %v985
        %v1039 = vpop.f32.mrf.mxu0
        %v1040 = vadd.f32 0.0, %v1039
        %v1041 = vpop.f32.mrf.mxu0
        %v1042 = vadd.f32 0.0, %v1041
        %1043 = vdwg.mxu0
        %1044 = vmatpush.bf16.msra.mxu0 0
        %1045 = vmatpush.bf16.msra.mxu0 0
        %1046 = vmatpush.bf16.msra.mxu0 0
        %1047 = vmatpush.bf16.msra.mxu0 0
        %1048 = vmatpush.bf16.msra.mxu0 0
        %1049 = vmatpush.bf16.msra.mxu0 0
        %1050 = vmatpush.bf16.msra.mxu0 0
        %1051 = vmatpush.bf16.msra.mxu0 %v975
        %1052 = vmatmul.bf16.gmra.mxu0 %v982
        %v1053 = vpop.f32.mrf.mxu0
        %v1054 = vadd.f32 0.0, %v1053
        %v1055 = vpop.f32.mrf.mxu0
        %v1056 = vadd.f32 0.0, %v1055
        %1057 = vmatmul.bf16.gmra.mxu0 %v985
        %v1058 = vpop.f32.mrf.mxu0
        %v1059 = vadd.f32 0.0, %v1058
        %v1060 = vpop.f32.mrf.mxu0
        %v1061 = vadd.f32 0.0, %v1060
        %1062 = vdwg.mxu0
        %1063 = vst [vmem:[%s187] sm:$0xff] %v997
        %1064 = vst [vmem:[%s187 + $0x8] sm:$0xff] %v1016
        %1065 = vst [vmem:[%s187 + $0x10] sm:$0xff] %v1035
        %1066 = vst [vmem:[%s187 + $0x18] sm:$0xff] %v1054
        %1067 = vst [vmem:[%s187 + $0x20] sm:$0xff] %v999
        %1068 = vst [vmem:[%s187 + $0x28] sm:$0xff] %v1018
        %1069 = vst [vmem:[%s187 + $0x30] sm:$0xff] %v1037
        %1070 = vst [vmem:[%s187 + $0x38] sm:$0xff] %v1056
        %1071 = vst [vmem:[%s187 + $0x40] sm:$0xff] %v1002
        %1072 = vst [vmem:[%s187 + $0x48] sm:$0xff] %v1021
        %1073 = vst [vmem:[%s187 + $0x50] sm:$0xff] %v1040
        %1074 = vst [vmem:[%s187 + $0x58] sm:$0xff] %v1059
        %1075 = vst [vmem:[%s187 + $0x60] sm:$0xff] %v1004
        %1076 = vst [vmem:[%s187 + $0x68] sm:$0xff] %v1023
        %1077 = vst [vmem:[%s187 + $0x70] sm:$0xff] %v1042
        %1078 = vst [vmem:[%s187 + $0x78] sm:$0xff] %v1061
        %p1079 = scmp.lt.s32.totalorder %s15, 1
        %s1080 = scalar_select %p1079, %s15, 1
        %s1081 = smul.addr %s1080, 16
        %s1082 = smul.addr %s1081, 8
        %s1083 = scalar_lea.vmem %s3, %s1082
        // Predicated region
        $region37: #{upsample_forward_nhwc.1} parent=31 // pred_check
          %p1084 = pneg %p101
        $region38: #{upsample_forward_nhwc.1} parent=31 // pred_check_branch
          %1086 = sbr.rel (%p1084) target = $region40
        $region39: #{upsample_forward_nhwc.1} parent=31 // pred_region
          _
        $region40: #{upsample_forward_nhwc.1} parent=31 // pred_fallthru
          _
      $region32: #{upsample_forward_nhwc.1} parent=5 // pred_fallthru
        _
      %p1087 = scmp.le.s32.totalorder 2, %s10
      // Predicated region
      $region41: #{upsample_forward_nhwc.1} parent=5 // pred_check
        %p1088 = pneg %p1087
      $region42: #{upsample_forward_nhwc.1} parent=5 // pred_check_branch
        %1090 = sbr.rel (%p1088) target = $region44
      $region43: #{upsample_forward_nhwc.1} parent=5 // pred_region
        %s1091 = ssub.s32 %s10, 2
        // Predicated region
        $region45: #{upsample_forward_nhwc.1} parent=43 // pred_check
          %p1092 = pneg %p107
        $region46: #{upsample_forward_nhwc.1} parent=43 // pred_check_branch
          %1094 = sbr.rel (%p1092) target = $region48
        $region47: #{upsample_forward_nhwc.1} parent=43 // pred_region
          %p1095 = scmp.lt.s32.totalorder %s16, 1
          %s1096 = scalar_select %p1095, %s16, 1
          %s1097 = smul.addr %s1096, 16
          %s1098 = smul.addr %s1097, 8
          %s1099 = scalar_lea.vmem %s3, %s1098
        $region48: #{upsample_forward_nhwc.1} parent=43 // pred_fallthru
          _
      $region44: #{upsample_forward_nhwc.1} parent=5 // pred_fallthru
        _
    $region6: #{upsample_forward_nhwc.1} parent=1 // loop_footer
      %s14 = sadd.s32 1, %s10
    $region7: #{upsample_forward_nhwc.1} parent=1 // loop_footer_branch
      %9 = sbr.rel target = $region3
    $region8: #{upsample_forward_nhwc.1} parent=1 // loop_exit
      _
    %1100 = vsyncpa [#allocation3], 1
    %s1101 = scalar_lea.sflag [#allocation3], 1
    %1102 = vsyncpa %s1101, 1

</llo_original>
